<compile_context>
chip_gen: v5e
topology: v5e:2x2
jax: 0.10.0
libtpu: 0.0.40
codegen_flags: <defaults>
</compile_context>

<pallas_src>
import functools

import jax
import jax.numpy as jnp
from jax.experimental import pallas as pl
from jax.experimental.pallas import tpu as pltpu


def _recon_loss_kernel(x_ref, t_ref, o_ref, *, losstype, eps, total_elems,
                       block_rows, lanes, grid_rows, steps_per_core,
                       need_mask):
    c = pl.program_id(0)          # core / parallel axis
    i = pl.program_id(1)          # per-core step (arbitrary axis)
    lin = c * steps_per_core + i  # linear block index (may exceed grid_rows-1)
    last_real = grid_rows - 1     # static

    # Per-core output block doubles as the accumulator: zero it on the first
    # per-core step (also covers cores whose every step is virtual).
    @pl.when(i == 0)
    def _():
        o_ref[...] = jnp.zeros_like(o_ref)

    def accumulate(contrib):
        if block_rows % 8 == 0:
            # (block_rows, L) -> (block_rows//8, 8, L) is a major-dim split
            # (layout-preserving); the axis-0 sum is pure VPU adds, no XLU.
            o_ref[...] += contrib.reshape(block_rows // 8, 8, lanes).sum(axis=0)
        else:
            # Full-extent single block (block_rows == rows): reduce rows
            # directly into the first accumulator row.
            o_ref[0:1, :] += jnp.sum(contrib, axis=0, keepdims=True)

    def body(masked):
        diff = x_ref[...].astype(jnp.float32) - t_ref[...].astype(jnp.float32)
        if losstype == "l2":
            contrib = diff * diff
        else:  # 'l1' (charbonnier); sqrt uses the EUP slot -> free under HBM
            contrib = jnp.sqrt(diff * diff + jnp.float32(eps))

        if masked:
            # Only the last real block can contain out-of-range elements; mask
            # them with decomposed compares (no flat-index multiply) right
            # before accumulation so OOB garbage never reaches the adds.
            row0 = last_real * block_rows      # static
            full_rows = total_elems // lanes   # static
            rem = total_elems % lanes          # static
            row = row0 + jax.lax.broadcasted_iota(jnp.int32, contrib.shape, 0)
            mask = row < full_rows
            if rem:
                col = jax.lax.broadcasted_iota(jnp.int32, contrib.shape, 1)
                mask = jnp.logical_or(
                    mask, jnp.logical_and(row == full_rows, col < rem))
            contrib = jnp.where(mask, contrib, 0.0)

        accumulate(contrib)

    # Unmasked fast path for every block except the last real one.
    if grid_rows > 1:
        @pl.when(lin < last_real)
        def _():
            body(False)

    # Last real block: mask only if the tail is ragged / flat-padded.
    # Virtual steps (lin > last_real, created by the per-core split) fall
    # through both predicates and contribute nothing.
    @pl.when(lin == last_real)
    def _():
        body(need_mask)


def reconstruction_loss(x, target, losstype="l2", eps=1e-6,
                        block_bytes=4 * 1024 * 1024):
    """Pallas implementation of ReconstructionLoss.forward (x, target: NCHW)."""
    if losstype not in ("l2", "l1"):
        raise ValueError(f"unsupported losstype: {losstype}")
    assert x.shape == target.shape
    n_batch = x.shape[0]
    total = x.size

    xf = x.reshape(-1)
    tf = target.reshape(-1)

    # Lane width: largest of these dividing the element count (free reshape,
    # no HBM copy).
    lanes = None
    for cand in (2048, 1024, 512, 256, 128):
        if total % cand == 0:
            lanes = cand
            break
    if lanes is None:
        # Rare fallback: element count not a multiple of 128 -> pad the flat
        # view (one extra HBM pass); padded elements are masked in-kernel.
        # TODO(synk): switch to aligned-prefix kernel + tiny wrapper-side tail
        # reduce if xprof shows the pad copy dominating for these shapes.
        lanes = 512
        padded = pl.cdiv(total, lanes) * lanes
        xf = jnp.pad(xf, (0, padded - total))
        tf = jnp.pad(tf, (0, padded - total))
    else:
        padded = total

    rows = padded // lanes
    x2 = xf.reshape(rows, lanes)
    t2 = tf.reshape(rows, lanes)

    # ~block_bytes per input block (2 inputs x 2 buffers in VMEM).
    itemsize = x.dtype.itemsize
    block_rows = max(8, (block_bytes // (lanes * itemsize)) // 8 * 8)
    if block_rows >= rows:
        block_rows = rows            # single full-extent block (always legal)
    grid_rows = pl.cdiv(rows, block_rows)
    need_mask = (grid_rows * block_rows * lanes != total)

    # Split the block stream across TensorCores (v7x has 2 per chip; on 1-TC
    # chips the "parallel" axis just runs serially and is equally correct).
    num_cores = 2 if grid_rows >= 2 else 1
    steps_per_core = pl.cdiv(grid_rows, num_cores)

    def in_map(c, i):
        # Clamp virtual steps (when grid_rows is not a multiple of num_cores)
        # onto the last real block; the kernel skips their accumulation.
        return (jnp.minimum(c * steps_per_core + i, grid_rows - 1), 0)

    kernel = functools.partial(
        _recon_loss_kernel, losstype=losstype, eps=eps, total_elems=total,
        block_rows=block_rows, lanes=lanes, grid_rows=grid_rows,
        steps_per_core=steps_per_core, need_mask=need_mask)

    cost = pl.CostEstimate(
        flops=3 * total,
        transcendentals=(total if losstype == "l1" else 0),
        bytes_accessed=2 * total * itemsize + num_cores * 8 * lanes * 4)

    partials = pl.pallas_call(
        kernel,
        out_shape=jax.ShapeDtypeStruct((num_cores * 8, lanes), jnp.float32),
        grid_spec=pltpu.PrefetchScalarGridSpec(
            num_scalar_prefetch=0,
            grid=(num_cores, steps_per_core),
            in_specs=[
                pl.BlockSpec((block_rows, lanes), in_map),
                pl.BlockSpec((block_rows, lanes), in_map),
            ],
            # One resident (8, lanes) accumulator block per core.
            out_specs=pl.BlockSpec((8, lanes), lambda c, i: (c, 0)),
        ),
        compiler_params=pltpu.CompilerParams(
            dimension_semantics=("parallel", "arbitrary"),
            # 4 MiB x 2 inputs x 2 buffers (+ f32 temporaries) needs more than
            # the 16 MiB v5e scoped default; 48 MiB fits every generation
            # (v7x physical VMEM is 64 MiB per TC).
            vmem_limit_bytes=48 * 1024 * 1024),
        cost_estimate=cost,
    )(x2, t2)

    # Tiny final reduction (<= 16 x 2048 f32) + mean over batch in the wrapper.
    return jnp.sum(partials) / jnp.float32(n_batch)


def _reference(x, target, losstype="l2", eps=1e-6):
    if losstype == "l2":
        return jnp.mean(jnp.sum((x - target) ** 2, axis=(1, 2, 3)))
    diff = x - target
    return jnp.mean(jnp.sum(jnp.sqrt(diff * diff + eps), axis=(1, 2, 3)))


if __name__ == "__main__":
    key = jax.random.PRNGKey(0)

    # Shapes exercising: single full block; non-multiple-of-8 row count;
    # clean 2-core split at default blocks; many-step grid with masked ragged
    # tail + clamped virtual step (small blocks); flat-pad fallback path.
    cases = [
        ((2, 4, 16, 16), None),
        ((2, 3, 24, 24), None),
        ((2, 8, 256, 512), None),
        ((4, 8, 144, 144), 64 * 1024),
        ((3, 5, 7, 11), None),
    ]

    ok = True
    for shape, bb in cases:
        key, k1, k2 = jax.random.split(key, 3)
        x = jax.random.normal(k1, shape, dtype=jnp.float32)
        target = jax.random.normal(k2, shape, dtype=jnp.float32)
        for losstype in ("l2", "l1"):
            kwargs = {} if bb is None else {"block_bytes": bb}
            got = jax.block_until_ready(
                reconstruction_loss(x, target, losstype=losstype, **kwargs))
            ref = _reference(x, target, losstype=losstype)
            if not jnp.allclose(got, ref, rtol=5e-5, atol=1e-4):
                ok = False
                print(f"MISMATCH {shape} {losstype}: got {got}, ref {ref}")

    if ok:
        print("KERNEL_OK")
</pallas_src>

<mosaic_0001>
module attributes {stable_mosaic.version = 11 : i64} {
  func.func @_recon_loss_kernel(%arg0: i32, %arg1: i32, %arg2: memref<1x2048xf32, #tpu.memory_space<vmem>>, %arg3: memref<1x2048xf32, #tpu.memory_space<vmem>>, %arg4: memref<8x2048xf32, #tpu.memory_space<vmem>>) attributes {dimension_semantics = [#tpu.dimension_semantics<parallel>, #tpu.dimension_semantics<arbitrary>], iteration_bounds = array<i64: 1, 1>, scalar_prefetch = 0 : i64, scratch_operands = 0 : i64, tpu.core_type = #tpu.core_type<tc>, window_params = [{transform_indices = @transform_0, window_bounds = array<i64: 1, 2048>}, {transform_indices = @transform_1, window_bounds = array<i64: 1, 2048>}, {transform_indices = @transform_2, window_bounds = array<i64: 8, 2048>}]} {
    %c1_i32 = arith.constant 1 : i32
    %0 = arith.muli %arg0, %c1_i32 : i32
    %1 = arith.addi %0, %arg1 : i32
    %c0_i32 = arith.constant 0 : i32
    %2 = arith.cmpi eq, %arg1, %c0_i32 : i32
    %3 = arith.extui %2 : i1 to i32
    %c0_i32_0 = arith.constant 0 : i32
    %4 = arith.cmpi ne, %3, %c0_i32_0 : i32
    scf.if %4 {
      %cst = arith.constant 0.000000e+00 : f32
      %8 = vector.broadcast %cst : f32 to vector<8x2048xf32>
      %c0 = arith.constant 0 : index
      %c0_3 = arith.constant 0 : index
      %9 = vector.load %arg4[%c0, %c0_3] : memref<8x2048xf32, #tpu.memory_space<vmem>>, vector<8x2048xf32>
      tpu.vector_store %arg4[%c0, %c0_3], %8 {strides = array<i32>} : memref<8x2048xf32, #tpu.memory_space<vmem>>, vector<8x2048xf32>,
    } else {
    }
    %c0_i32_1 = arith.constant 0 : i32
    %5 = arith.cmpi eq, %1, %c0_i32_1 : i32
    %6 = arith.extui %5 : i1 to i32
    %c0_i32_2 = arith.constant 0 : i32
    %7 = arith.cmpi ne, %6, %c0_i32_2 : i32
    scf.if %7 {
      %c0 = arith.constant 0 : index
      %c0_3 = arith.constant 0 : index
      %8 = vector.load %arg2[%c0, %c0_3] : memref<1x2048xf32, #tpu.memory_space<vmem>>, vector<1x2048xf32>
      %c0_4 = arith.constant 0 : index
      %c0_5 = arith.constant 0 : index
      %9 = vector.load %arg3[%c0_4, %c0_5] : memref<1x2048xf32, #tpu.memory_space<vmem>>, vector<1x2048xf32>
      %10 = arith.subf %8, %9 : vector<1x2048xf32>
      %11 = arith.mulf %10, %10 : vector<1x2048xf32>
      %c0_6 = arith.constant 0 : index
      %c0_7 = arith.constant 0 : index
      %12 = vector.load %arg4[%c0_6, %c0_7] : memref<8x2048xf32, #tpu.memory_space<vmem>>, vector<1x2048xf32>
      %cst = arith.constant dense<0.000000e+00> : vector<2048xf32>
      %13 = vector.multi_reduction <add>, %11, %cst [0] : vector<1x2048xf32> to vector<2048xf32>
      %14 = vector.shape_cast %13 : vector<2048xf32> to vector<1x2048xf32>
      %15 = arith.addf %12, %14 : vector<1x2048xf32>
      %c0_8 = arith.constant 0 : index
      %c0_9 = arith.constant 0 : index
      %16 = vector.load %arg4[%c0_8, %c0_9] : memref<8x2048xf32, #tpu.memory_space<vmem>>, vector<1x2048xf32>
      tpu.vector_store %arg4[%c0_8, %c0_9], %15 {strides = array<i32>} : memref<8x2048xf32, #tpu.memory_space<vmem>>, vector<1x2048xf32>,
    } else {
    }
    return
  }
  func.func @transform_0(%arg0: i32, %arg1: i32) -> (i32, i32) {
    %c1_i32 = arith.constant 1 : i32
    %0 = arith.muli %arg0, %c1_i32 : i32
    %1 = arith.addi %0, %arg1 : i32
    %c0_i32 = arith.constant 0 : i32
    %2 = arith.minsi %1, %c0_i32 : i32
    %c0_i32_0 = arith.constant 0 : i32
    %c0_i32_1 = arith.constant 0 : i32
    return %2, %c0_i32_0 : i32, i32
  }
  func.func @transform_1(%arg0: i32, %arg1: i32) -> (i32, i32) {
    %c1_i32 = arith.constant 1 : i32
    %0 = arith.muli %arg0, %c1_i32 : i32
    %1 = arith.addi %0, %arg1 : i32
    %c0_i32 = arith.constant 0 : i32
    %2 = arith.minsi %1, %c0_i32 : i32
    %c0_i32_0 = arith.constant 0 : i32
    %c0_i32_1 = arith.constant 0 : i32
    return %2, %c0_i32_0 : i32, i32
  }
  func.func @transform_2(%arg0: i32, %arg1: i32) -> (i32, i32) {
    %c0_i32 = arith.constant 0 : i32
    %c0_i32_0 = arith.constant 0 : i32
    return %arg0, %c0_i32 : i32, i32
  }
}

</mosaic_0001>

<llo_original>
// kernel: tpu_custom_call.1
$region0: #{tpu_custom_call.1}
  #allocation0 [shape = 'u32[]', space=smem, size = 0x4, offset = 0x4, fixed_abs, tag = 'smem constant byte address 0x4 - core index']
  #allocation1 [shape = 'u32[72,128]{1,0:T(1,128)}', space=vmem, size = 0x9000, scoped, tag = 'internal scratch']
  %s0 = inlined_call_operand.hbm [shape: f32[1,2048], index: 0, kind: input, shape index: {}]
  %s1 = inlined_call_operand.hbm [shape: f32[1,2048], index: 1, kind: input, shape index: {}]
  %s2 = inlined_call_operand.hbm [shape: f32[8,2048], index: 2, kind: output, shape index: {}]
  %s3 = sld [smem:[#allocation0]]
  $region34: #{tpu_custom_call.1} parent=0
    _
  %s5 = ssub.s32 1, %s3
  %s6 = scalar_select 0, %s5, %s3
  $region1: #{tpu_custom_call.1} parent=0
    #allocation2 [shape = 'u8[8192]{0}', space=vmem, size = 0x2000, scoped, tag = 'input window, operand 0, single buffered']
    #allocation3 [shape = 's32[1]{0}', space=sflag, size = 0x4, scoped, tag = 'scoped memory for tpu_custom_call.1']
    #allocation4 [shape = 's32[1]{0}', space=sflag, size = 0x4, scoped, tag = 'scoped memory for tpu_custom_call.1']
    #allocation5 [shape = 'u8[8192]{0}', space=vmem, size = 0x2000, scoped, tag = 'input window, operand 1, single buffered']
    #allocation6 [shape = 's32[1]{0}', space=sflag, size = 0x4, scoped, tag = 'scoped memory for tpu_custom_call.1']
    #allocation7 [shape = 'u8[65536]{0}', space=vmem, size = 0x10000, scoped, tag = 'output window, operand 0, single buffered']
    %7 = vsyncpa [#allocation3], 0
    %8 = vsyncpa [#allocation6], 0
    %9 = vsyncpa [#allocation4], 0
    // Predicated region
    $region2: #{tpu_custom_call.1} parent=1 // pred_check
      _
    $region3: #{tpu_custom_call.1} parent=1 // pred_check_branch
      %11 = sbr.rel (0) target = $region5
    $region4: #{tpu_custom_call.1} parent=1 // pred_region
      %s12 = sadd.s32 0, 0
      %p13 = scmp.lt.s32.totalorder %s12, 0
      %s14 = scalar_select %p13, %s12, 0
      %16 = vsyncadd [#allocation3], 0
      %s17 = smul.addr %s14, 16
      %s18 = scalar_lea.hbm %s0, %s17
      %s20 = sshll.u32 %s18, 4
      %s21 = int_to_ptr.hbm [resolvable:$true] %s20
      %s22 = sshll.u32 [#allocation2], 4
      %s23 = int_to_ptr.vmem [resolvable:$true] %s22
      %25 = dma.hbm_to_vmem [thread:$0]  %s21, 256, %s23, [#allocation3]
    $region5: #{tpu_custom_call.1} parent=1 // pred_fallthru
      _
    // Predicated region
    $region6: #{tpu_custom_call.1} parent=1 // pred_check
      _
    $region7: #{tpu_custom_call.1} parent=1 // pred_check_branch
      %27 = sbr.rel (0) target = $region9
    $region8: #{tpu_custom_call.1} parent=1 // pred_region
      %s28 = sadd.s32 0, 0
      %p29 = scmp.lt.s32.totalorder %s28, 0
      %s30 = scalar_select %p29, %s28, 0
      %32 = vsyncadd [#allocation6], 0
      %s33 = smul.addr %s30, 16
      %s34 = scalar_lea.hbm %s1, %s33
      %s36 = sshll.u32 %s34, 4
      %s37 = int_to_ptr.hbm [resolvable:$true] %s36
      %s38 = sshll.u32 [#allocation5], 4
      %s39 = int_to_ptr.vmem [resolvable:$true] %s38
      %41 = dma.hbm_to_vmem [thread:$0]  %s37, 256, %s39, [#allocation6]
    $region9: #{tpu_custom_call.1} parent=1 // pred_fallthru
      _
    // Predicated region
    $region10: #{tpu_custom_call.1} parent=1 // pred_check
      _
    $region11: #{tpu_custom_call.1} parent=1 // pred_check_branch
      %43 = sbr.rel (0) target = $region13
    $region12: #{tpu_custom_call.1} parent=1 // pred_region
      %45 = dma.done [#allocation3], 256
    $region13: #{tpu_custom_call.1} parent=1 // pred_fallthru
      _
    // Predicated region
    $region14: #{tpu_custom_call.1} parent=1 // pred_check
      _
    $region15: #{tpu_custom_call.1} parent=1 // pred_check_branch
      %47 = sbr.rel (0) target = $region17
    $region16: #{tpu_custom_call.1} parent=1 // pred_region
      %49 = dma.done [#allocation6], 256
    $region17: #{tpu_custom_call.1} parent=1 // pred_fallthru
      _
    %s50 = sadd.s32 0, 0
    %p51 = scmp.lt.s32.totalorder %s50, 0
    %s52 = scalar_select %p51, %s50, 0
    %s53 = sadd.s32 0, 0
    %p54 = scmp.lt.s32.totalorder %s53, 0
    %s55 = scalar_select %p54, %s53, 0
    %s56 = sadd.s32 0, 0
    %p57 = scmp.eq.s32.totalorder 0, 0
    // Predicated region
    $region18: #{tpu_custom_call.1} parent=1 // pred_check
      %p58 = pneg %p57
    $region19: #{tpu_custom_call.1} parent=1 // pred_check_branch
      %60 = sbr.rel (%p58) target = $region21
    $region20: #{tpu_custom_call.1} parent=1 // pred_region
      %61 = vst [vmem:[#allocation7] sm:$0xff] 0.0
      %62 = vst [vmem:[#allocation7 + $0x8] sm:$0xff] 0.0
      %63 = vst [vmem:[#allocation7 + $0x10] sm:$0xff] 0.0
      %64 = vst [vmem:[#allocation7 + $0x18] sm:$0xff] 0.0
      %65 = vst [vmem:[#allocation7 + $0x20] sm:$0xff] 0.0
      %66 = vst [vmem:[#allocation7 + $0x28] sm:$0xff] 0.0
      %67 = vst [vmem:[#allocation7 + $0x30] sm:$0xff] 0.0
      %68 = vst [vmem:[#allocation7 + $0x38] sm:$0xff] 0.0
      %69 = vst [vmem:[#allocation7 + $0x40] sm:$0xff] 0.0
      %70 = vst [vmem:[#allocation7 + $0x48] sm:$0xff] 0.0
      %71 = vst [vmem:[#allocation7 + $0x50] sm:$0xff] 0.0
      %72 = vst [vmem:[#allocation7 + $0x58] sm:$0xff] 0.0
      %73 = vst [vmem:[#allocation7 + $0x60] sm:$0xff] 0.0
      %74 = vst [vmem:[#allocation7 + $0x68] sm:$0xff] 0.0
      %75 = vst [vmem:[#allocation7 + $0x70] sm:$0xff] 0.0
      %76 = vst [vmem:[#allocation7 + $0x78] sm:$0xff] 0.0
    $region21: #{tpu_custom_call.1} parent=1 // pred_fallthru
      _
    %p77 = scmp.eq.s32.totalorder %s56, 0
    // Predicated region
    $region22: #{tpu_custom_call.1} parent=1 // pred_check
      %p78 = pneg %p77
    $region23: #{tpu_custom_call.1} parent=1 // pred_check_branch
      %80 = sbr.rel (%p78) target = $region25
    $region24: #{tpu_custom_call.1} parent=1 // pred_region
      %v81 = vld [vmem:[#allocation2] sm:$0xff]
      %v82 = vld [vmem:[#allocation2 + $0x8] sm:$0xff]
      %v83 = vld [vmem:[#allocation5] sm:$0xff]
      %v84 = vld [vmem:[#allocation5 + $0x8] sm:$0xff]
      %v85 = vsub.f32 %v81, %v83
      %v86 = vsub.f32 %v82, %v84
      %v87 = vmul.f32 %v85, %v85
      %v88 = vmul.f32 %v86, %v86
      %v89 = vld [vmem:[#allocation7] ss:$8 sm:$0xf]
      %v90 = vld [vmem:[#allocation7] ss:$8 sm:$0xf0]
      %v91 = vor.u32 %v89, %v90
      %s92 = scalar_lea.vmem [#allocation7], 64
      %v93 = vld [vmem:[%s92] ss:$8 sm:$0xf]
      %v94 = vld [vmem:[%s92] ss:$8 sm:$0xf0]
      %v95 = vor.u32 %v93, %v94
      %v96 = vadd.f32 %v87, 0.0
      %v97 = vadd.f32 %v88, 0.0
      %v98 = vadd.f32 %v91, %v96
      %v99 = vadd.f32 %v95, %v97
      %100 = vst [vmem:[#allocation7] ss:$8 sm:$0xf] %v98
      %101 = vst [vmem:[#allocation7] ss:$8 sm:$0xf0] %v98
      %102 = vst [vmem:[%s92] ss:$8 sm:$0xf] %v99
      %103 = vst [vmem:[%s92] ss:$8 sm:$0xf0] %v99
    $region25: #{tpu_custom_call.1} parent=1 // pred_fallthru
      _
    // Predicated region
    $region26: #{tpu_custom_call.1} parent=1 // pred_check
      _
    $region27: #{tpu_custom_call.1} parent=1 // pred_check_branch
      %105 = sbr.rel (0) target = $region29
    $region28: #{tpu_custom_call.1} parent=1 // pred_region
      %107 = vsyncadd [#allocation4], 0
      %s109 = sshll.u32 [#allocation7], 4
      %s110 = int_to_ptr.vmem [resolvable:$true] %s109
      %s111 = sshll.u32 %s2, 4
      %s112 = int_to_ptr.hbm [resolvable:$true] %s111
      %114 = dma.vmem_to_hbm [thread:$0]  %s110, 2048, %s112, [#allocation4]
    $region29: #{tpu_custom_call.1} parent=1 // pred_fallthru
      _
    // Predicated region
    $region30: #{tpu_custom_call.1} parent=1 // pred_check
      _
    $region31: #{tpu_custom_call.1} parent=1 // pred_check_branch
      %116 = sbr.rel (0) target = $region33
    $region32: #{tpu_custom_call.1} parent=1 // pred_region
      %118 = dma.done [#allocation4], 2048
    $region33: #{tpu_custom_call.1} parent=1 // pred_fallthru
      _
    %119 = vsyncpa [#allocation3], 1
    %120 = vsyncpa [#allocation6], 1
    %121 = vsyncpa [#allocation4], 1

</llo_original>
